<compile_context>
chip_gen: v6e
topology: v6e:2x2x1
jax: 0.10.0
libtpu: 0.0.40
codegen_flags: <defaults>
</compile_context>

<pallas_src>
import math
from functools import partial

import jax
import jax.numpy as jnp
from jax import lax
from jax.experimental import pallas as pl
from jax.experimental.pallas import tpu as pltpu


def _mha_kernel(x_ref, wqt_ref, wkt_ref, wvt_ref, o_ref, k_sc, v_sc,
                *, scale, num_heads, q_tile):
    # x_ref  : (1, S, E)       full batch row (resident across all qi steps)
    # w*t_ref: (E, E)          transposed projection weights (x @ W.T)
    # o_ref  : (1, q_tile, E)  lane-dense output block in final (B, S, E) layout
    # k_sc/v_sc : (S, E) VMEM scratch, persists across the qi grid axis
    qi = pl.program_id(1)
    S = x_ref.shape[1]
    E = x_ref.shape[2]
    D = E // num_heads
    compute_dt = k_sc.dtype

    # K / V projections are shared by every query tile of this batch row:
    # compute them once (qi == 0), keep them resident in VMEM scratch.
    # Full E-wide matmuls -> the MXU is fed N=E, not N=D.
    @pl.when(qi == 0)
    def _():
        x_full = x_ref[0]                                            # (S, E)
        k_sc[...] = jnp.dot(x_full, wkt_ref[...],
                            preferred_element_type=jnp.float32).astype(compute_dt)
        v_sc[...] = jnp.dot(x_full, wvt_ref[...],
                            preferred_element_type=jnp.float32).astype(compute_dt)

    # Q projection for this query tile only (also E-wide on the MXU).
    if q_tile == S:
        x_q = x_ref[0]                                               # (S, E)
    else:
        row0 = pl.multiple_of(qi * q_tile, q_tile)
        x_q = x_ref[0, pl.ds(row0, q_tile), :]                       # (q_tile, E)

    # Fold the 1/sqrt(E) scale into Q once (cheaper than scaling every score).
    q = (jnp.dot(x_q, wqt_ref[...],
                 preferred_element_type=jnp.float32) * scale).astype(compute_dt)

    k = k_sc[...]                                                    # (S, E)
    v = v_sc[...]                                                    # (S, E)

    # Per-head attention.  Head slices are static lane slices of the E-wide
    # projections; Q@K^T contracts over D via dot_general (no explicit K.T).
    contract_last = (((1,), (1,)), ((), ()))
    head_outs = []
    for h in range(num_heads):
        lo, hi = h * D, (h + 1) * D
        qh = q[:, lo:hi]                                             # (q_tile, D)
        kh = k[:, lo:hi]                                             # (S, D)
        vh = v[:, lo:hi]                                             # (S, D)

        s = lax.dot_general(qh, kh, contract_last,
                            preferred_element_type=jnp.float32)      # (q_tile, S)

        # numerically stable softmax over keys; reciprocal goes to the EUP
        m = jnp.max(s, axis=-1, keepdims=True)
        p = jnp.exp(s - m)
        denom = jnp.sum(p, axis=-1, keepdims=True)
        attn = p * pl.reciprocal(denom, approx=True)

        oh = jnp.dot(attn.astype(vh.dtype), vh,
                     preferred_element_type=jnp.float32)             # (q_tile, D)
        head_outs.append(oh)

    # One full-width lane-dense store per grid step (no per-head masked stores).
    out_tile = jnp.concatenate(head_outs, axis=-1)                   # (q_tile, E)
    o_ref[0, :, :] = out_tile.astype(o_ref.dtype)


def _choose_q_tile(S, max_tile=512):
    """Largest query tile <= max_tile that is a multiple of 8 and divides S."""
    if S <= max_tile:
        return S
    for t in range(max_tile, 0, -8):
        if t % 8 == 0 and S % t == 0:
            return t
    return S


def mha_forward(x, wq, wk, wv, attention_count, *,
                q_tile=None, compute_dtype=None, vmem_limit_bytes=None):
    """x: (B, S, E); wq/wk/wv: (E, E) PyTorch-style nn.Linear weights (out, in).

    compute_dtype: e.g. jnp.bfloat16 for MXU peak on v5e/v6e/v7x (f32
        accumulation is kept).  Default keeps the input dtype.
    vmem_limit_bytes: raise for long sequences (e.g. ~96 MiB on v5e/v6e,
        <=~48 MiB on v7x) to allow larger q_tiles.
    """
    B, S, E = x.shape
    H = attention_count
    D = E // H
    assert H * D == E, "attentions count unmatched"
    scale = 1.0 / math.sqrt(float(E))

    out_dtype = x.dtype
    if compute_dtype is not None:
        x = x.astype(compute_dtype)
        wq = wq.astype(compute_dtype)
        wk = wk.astype(compute_dtype)
        wv = wv.astype(compute_dtype)
    dt = x.dtype

    # nn.Linear computes y = x @ W.T -> hand the kernel the transposed weights
    # once (tiny one-time (E, E) transpose outside the kernel).
    wqt, wkt, wvt = wq.T, wk.T, wv.T

    if q_tile is None:
        q_tile = _choose_q_tile(S)
    assert S % q_tile == 0, "q_tile must divide S"
    nq = S // q_tile

    itemsize = jnp.dtype(dt).itemsize
    cost = pl.CostEstimate(
        flops=2 * B * S * E * E * 3 + 2 * B * H * S * S * D * 2,
        transcendentals=B * H * S * S,
        bytes_accessed=(B * S * E + 3 * E * E) * itemsize
                       + B * S * E * jnp.dtype(out_dtype).itemsize,
    )

    out = pl.pallas_call(
        partial(_mha_kernel, scale=scale, num_heads=H, q_tile=q_tile),
        out_shape=jax.ShapeDtypeStruct((B, S, E), out_dtype),
        grid_spec=pltpu.PrefetchScalarGridSpec(
            num_scalar_prefetch=0,
            grid=(B, nq),
            in_specs=[
                # x: constant over qi -> DMA'd once per batch row
                pl.BlockSpec((1, S, E), lambda b, qi: (b, 0, 0)),
                # weights: constant over the whole grid -> DMA'd once total
                pl.BlockSpec((E, E), lambda b, qi: (0, 0)),
                pl.BlockSpec((E, E), lambda b, qi: (0, 0)),
                pl.BlockSpec((E, E), lambda b, qi: (0, 0)),
            ],
            # output written directly in (B, S, E) layout (lane-dense E last)
            out_specs=pl.BlockSpec((1, q_tile, E), lambda b, qi: (b, qi, 0)),
            scratch_shapes=[
                pltpu.VMEM((S, E), dt),   # K projection, reused across q tiles
                pltpu.VMEM((S, E), dt),   # V projection, reused across q tiles
            ],
        ),
        compiler_params=pltpu.CompilerParams(
            # batch axis parallel (megacore on v7x); qi axis carries K/V scratch
            # state so it must stay "arbitrary".
            dimension_semantics=("parallel", "arbitrary"),
            vmem_limit_bytes=vmem_limit_bytes,
        ),
        cost_estimate=cost,
    )(x, wqt, wkt, wvt)
    return out


def mha_reference(x, wq, wk, wv, attention_count):
    """Pure-JAX reference mirroring the PyTorch forward exactly."""
    B, S, E = x.shape
    H = attention_count
    D = E // H
    Q = (x @ wq.T).reshape(B, S, H, D).transpose(0, 2, 1, 3)   # (B,H,S,D)
    K = (x @ wk.T).reshape(B, S, H, D).transpose(0, 2, 3, 1)   # (B,H,D,S)
    V = (x @ wv.T).reshape(B, S, H, D).transpose(0, 2, 1, 3)   # (B,H,S,D)
    score = jnp.einsum('bijk,bikl->bijl', Q, K) / math.sqrt(E)
    dist = jax.nn.softmax(score, axis=-1)
    out = jnp.einsum('bijk,bikl->bijl', dist, V)
    return out.transpose(0, 2, 1, 3).reshape(B, S, E)


if __name__ == "__main__":
    B, S, E, H = 2, 8, 32, 4

    key = jax.random.PRNGKey(0)
    kx, kq, kk, kv = jax.random.split(key, 4)

    x = jax.random.normal(kx, (B, S, E), dtype=jnp.float32)
    bound = 1.0 / math.sqrt(E)   # nn.Linear default init range
    wq = jax.random.uniform(kq, (E, E), jnp.float32, -bound, bound)
    wk = jax.random.uniform(kk, (E, E), jnp.float32, -bound, bound)
    wv = jax.random.uniform(kv, (E, E), jnp.float32, -bound, bound)

    out = mha_forward(x, wq, wk, wv, H)
    out = jax.block_until_ready(out)

    ref = mha_reference(x, wq, wk, wv, H)
    assert out.shape == (B, S, E)
    # Tolerance is looser than 1e-5 because the softmax denominator uses the
    # EUP approximate reciprocal (pl.reciprocal(..., approx=True)); the f32
    # accumulation path keeps the error well below this bound.
    assert jnp.allclose(out, ref, atol=2e-3, rtol=2e-3), \
        f"max err {jnp.max(jnp.abs(out - ref))}"

    print("KERNEL_OK")
</pallas_src>

<mosaic_0001>
module attributes {stable_mosaic.version = 11 : i64} {
  func.func @_mha_kernel(%arg0: i32, %arg1: i32, %arg2: memref<1x8x32xf32, #tpu.memory_space<vmem>>, %arg3: memref<32x32xf32, #tpu.memory_space<vmem>>, %arg4: memref<32x32xf32, #tpu.memory_space<vmem>>, %arg5: memref<32x32xf32, #tpu.memory_space<vmem>>, %arg6: memref<1x8x32xf32, #tpu.memory_space<vmem>>, %arg7: memref<8x32xf32, #tpu.memory_space<vmem>>, %arg8: memref<8x32xf32, #tpu.memory_space<vmem>>) attributes {dimension_semantics = [#tpu.dimension_semantics<parallel>, #tpu.dimension_semantics<arbitrary>], iteration_bounds = array<i64: 2, 1>, scalar_prefetch = 0 : i64, scratch_operands = 2 : i64, tpu.core_type = #tpu.core_type<tc>, window_params = [{transform_indices = @transform_0, window_bounds = array<i64: 1, 8, 32>}, {pipeline_mode = #tpu.pipeline_mode<synchronous>, transform_indices = @transform_1, window_bounds = array<i64: 32, 32>}, {pipeline_mode = #tpu.pipeline_mode<synchronous>, transform_indices = @transform_2, window_bounds = array<i64: 32, 32>}, {pipeline_mode = #tpu.pipeline_mode<synchronous>, transform_indices = @transform_3, window_bounds = array<i64: 32, 32>}, {transform_indices = @transform_4, window_bounds = array<i64: 1, 8, 32>}]} {
    %c0_i32 = arith.constant 0 : i32
    %0 = arith.cmpi eq, %arg1, %c0_i32 : i32
    %1 = arith.extui %0 : i1 to i32
    %c0_i32_0 = arith.constant 0 : i32
    %2 = arith.cmpi ne, %1, %c0_i32_0 : i32
    scf.if %2 {
      %c0_29 = arith.constant 0 : index
      %c0_30 = arith.constant 0 : index
      %c0_31 = arith.constant 0 : index
      %75 = vector.load %arg2[%c0_29, %c0_30, %c0_31] : memref<1x8x32xf32, #tpu.memory_space<vmem>>, vector<1x8x32xf32>
      %76 = vector.shape_cast %75 : vector<1x8x32xf32> to vector<8x32xf32>
      %c0_32 = arith.constant 0 : index
      %c0_33 = arith.constant 0 : index
      %77 = vector.load %arg4[%c0_32, %c0_33] : memref<32x32xf32, #tpu.memory_space<vmem>>, vector<32x32xf32>
      %cst_34 = arith.constant dense<0.000000e+00> : vector<8x32xf32>
      %78 = tpu.matmul %76, %77, %cst_34 {dimension_numbers = #tpu.dot_dimension_numbers<[1], [0], [0], [1], [0, 0, 1, 1], [], []>} : vector<8x32xf32>, vector<32x32xf32>, vector<8x32xf32> -> vector<8x32xf32>
      %c0_35 = arith.constant 0 : index
      %c0_36 = arith.constant 0 : index
      %79 = vector.load %arg7[%c0_35, %c0_36] : memref<8x32xf32, #tpu.memory_space<vmem>>, vector<8x32xf32>
      tpu.vector_store %arg7[%c0_35, %c0_36], %78 {strides = array<i32>} : memref<8x32xf32, #tpu.memory_space<vmem>>, vector<8x32xf32>,
      %c0_37 = arith.constant 0 : index
      %c0_38 = arith.constant 0 : index
      %80 = vector.load %arg5[%c0_37, %c0_38] : memref<32x32xf32, #tpu.memory_space<vmem>>, vector<32x32xf32>
      %cst_39 = arith.constant dense<0.000000e+00> : vector<8x32xf32>
      %81 = tpu.matmul %76, %80, %cst_39 {dimension_numbers = #tpu.dot_dimension_numbers<[1], [0], [0], [1], [0, 0, 1, 1], [], []>} : vector<8x32xf32>, vector<32x32xf32>, vector<8x32xf32> -> vector<8x32xf32>
      %c0_40 = arith.constant 0 : index
      %c0_41 = arith.constant 0 : index
      %82 = vector.load %arg8[%c0_40, %c0_41] : memref<8x32xf32, #tpu.memory_space<vmem>>, vector<8x32xf32>
      tpu.vector_store %arg8[%c0_40, %c0_41], %81 {strides = array<i32>} : memref<8x32xf32, #tpu.memory_space<vmem>>, vector<8x32xf32>,
    } else {
    }
    %c0 = arith.constant 0 : index
    %c0_1 = arith.constant 0 : index
    %c0_2 = arith.constant 0 : index
    %3 = vector.load %arg2[%c0, %c0_1, %c0_2] : memref<1x8x32xf32, #tpu.memory_space<vmem>>, vector<1x8x32xf32>
    %4 = vector.shape_cast %3 : vector<1x8x32xf32> to vector<8x32xf32>
    %c0_3 = arith.constant 0 : index
    %c0_4 = arith.constant 0 : index
    %5 = vector.load %arg3[%c0_3, %c0_4] : memref<32x32xf32, #tpu.memory_space<vmem>>, vector<32x32xf32>
    %cst = arith.constant dense<0.000000e+00> : vector<8x32xf32>
    %6 = tpu.matmul %4, %5, %cst {dimension_numbers = #tpu.dot_dimension_numbers<[1], [0], [0], [1], [0, 0, 1, 1], [], []>} : vector<8x32xf32>, vector<32x32xf32>, vector<8x32xf32> -> vector<8x32xf32>
    %cst_5 = arith.constant 0.176776692 : f32
    %7 = vector.broadcast %cst_5 : f32 to vector<8x32xf32>
    %8 = arith.mulf %6, %7 : vector<8x32xf32>
    %c0_6 = arith.constant 0 : index
    %c0_7 = arith.constant 0 : index
    %9 = vector.load %arg7[%c0_6, %c0_7] : memref<8x32xf32, #tpu.memory_space<vmem>>, vector<8x32xf32>
    %c0_8 = arith.constant 0 : index
    %c0_9 = arith.constant 0 : index
    %10 = vector.load %arg8[%c0_8, %c0_9] : memref<8x32xf32, #tpu.memory_space<vmem>>, vector<8x32xf32>
    %11 = vector.extract_strided_slice %8 {offsets = [0, 0], sizes = [8, 8], strides = [1, 1]} : vector<8x32xf32> to vector<8x8xf32>
    %12 = vector.extract_strided_slice %9 {offsets = [0, 0], sizes = [8, 8], strides = [1, 1]} : vector<8x32xf32> to vector<8x8xf32>
    %13 = vector.extract_strided_slice %10 {offsets = [0, 0], sizes = [8, 8], strides = [1, 1]} : vector<8x32xf32> to vector<8x8xf32>
    %cst_10 = arith.constant dense<0.000000e+00> : vector<8x8xf32>
    %14 = tpu.matmul %11, %12, %cst_10 {dimension_numbers = #tpu.dot_dimension_numbers<[1], [1], [0], [0], [0, 0, 1, 0], [], []>} : vector<8x8xf32>, vector<8x8xf32>, vector<8x8xf32> -> vector<8x8xf32>
    %cst_11 = arith.constant dense<0xFF800000> : vector<8xf32>
    %15 = vector.multi_reduction <maximumf>, %14, %cst_11 [1] : vector<8x8xf32> to vector<8xf32>
    %16 = vector.shape_cast %15 : vector<8xf32> to vector<8x1xf32>
    %17 = vector.broadcast %16 : vector<8x1xf32> to vector<8x8xf32>
    %18 = arith.subf %14, %17 : vector<8x8xf32>
    %19 = math.exp %18 : vector<8x8xf32>
    %cst_12 = arith.constant dense<0.000000e+00> : vector<8xf32>
    %20 = vector.multi_reduction <add>, %19, %cst_12 [1] : vector<8x8xf32> to vector<8xf32>
    %21 = vector.shape_cast %20 : vector<8xf32> to vector<8x1xf32>
    %22 = tpu.reciprocal %21 {approx = true} : vector<8x1xf32> -> vector<8x1xf32>
    %23 = vector.broadcast %22 : vector<8x1xf32> to vector<8x8xf32>
    %24 = arith.mulf %19, %23 : vector<8x8xf32>
    %cst_13 = arith.constant dense<0.000000e+00> : vector<8x8xf32>
    %25 = tpu.matmul %24, %13, %cst_13 {dimension_numbers = #tpu.dot_dimension_numbers<[1], [0], [0], [1], [0, 0, 1, 1], [], []>} : vector<8x8xf32>, vector<8x8xf32>, vector<8x8xf32> -> vector<8x8xf32>
    %26 = vector.extract_strided_slice %8 {offsets = [0, 8], sizes = [8, 8], strides = [1, 1]} : vector<8x32xf32> to vector<8x8xf32>
    %27 = vector.extract_strided_slice %9 {offsets = [0, 8], sizes = [8, 8], strides = [1, 1]} : vector<8x32xf32> to vector<8x8xf32>
    %28 = vector.extract_strided_slice %10 {offsets = [0, 8], sizes = [8, 8], strides = [1, 1]} : vector<8x32xf32> to vector<8x8xf32>
    %cst_14 = arith.constant dense<0.000000e+00> : vector<8x8xf32>
    %29 = tpu.matmul %26, %27, %cst_14 {dimension_numbers = #tpu.dot_dimension_numbers<[1], [1], [0], [0], [0, 0, 1, 0], [], []>} : vector<8x8xf32>, vector<8x8xf32>, vector<8x8xf32> -> vector<8x8xf32>
    %cst_15 = arith.constant dense<0xFF800000> : vector<8xf32>
    %30 = vector.multi_reduction <maximumf>, %29, %cst_15 [1] : vector<8x8xf32> to vector<8xf32>
    %31 = vector.shape_cast %30 : vector<8xf32> to vector<8x1xf32>
    %32 = vector.broadcast %31 : vector<8x1xf32> to vector<8x8xf32>
    %33 = arith.subf %29, %32 : vector<8x8xf32>
    %34 = math.exp %33 : vector<8x8xf32>
    %cst_16 = arith.constant dense<0.000000e+00> : vector<8xf32>
    %35 = vector.multi_reduction <add>, %34, %cst_16 [1] : vector<8x8xf32> to vector<8xf32>
    %36 = vector.shape_cast %35 : vector<8xf32> to vector<8x1xf32>
    %37 = tpu.reciprocal %36 {approx = true} : vector<8x1xf32> -> vector<8x1xf32>
    %38 = vector.broadcast %37 : vector<8x1xf32> to vector<8x8xf32>
    %39 = arith.mulf %34, %38 : vector<8x8xf32>
    %cst_17 = arith.constant dense<0.000000e+00> : vector<8x8xf32>
    %40 = tpu.matmul %39, %28, %cst_17 {dimension_numbers = #tpu.dot_dimension_numbers<[1], [0], [0], [1], [0, 0, 1, 1], [], []>} : vector<8x8xf32>, vector<8x8xf32>, vector<8x8xf32> -> vector<8x8xf32>
    %41 = vector.extract_strided_slice %8 {offsets = [0, 16], sizes = [8, 8], strides = [1, 1]} : vector<8x32xf32> to vector<8x8xf32>
    %42 = vector.extract_strided_slice %9 {offsets = [0, 16], sizes = [8, 8], strides = [1, 1]} : vector<8x32xf32> to vector<8x8xf32>
    %43 = vector.extract_strided_slice %10 {offsets = [0, 16], sizes = [8, 8], strides = [1, 1]} : vector<8x32xf32> to vector<8x8xf32>
    %cst_18 = arith.constant dense<0.000000e+00> : vector<8x8xf32>
    %44 = tpu.matmul %41, %42, %cst_18 {dimension_numbers = #tpu.dot_dimension_numbers<[1], [1], [0], [0], [0, 0, 1, 0], [], []>} : vector<8x8xf32>, vector<8x8xf32>, vector<8x8xf32> -> vector<8x8xf32>
    %cst_19 = arith.constant dense<0xFF800000> : vector<8xf32>
    %45 = vector.multi_reduction <maximumf>, %44, %cst_19 [1] : vector<8x8xf32> to vector<8xf32>
    %46 = vector.shape_cast %45 : vector<8xf32> to vector<8x1xf32>
    %47 = vector.broadcast %46 : vector<8x1xf32> to vector<8x8xf32>
    %48 = arith.subf %44, %47 : vector<8x8xf32>
    %49 = math.exp %48 : vector<8x8xf32>
    %cst_20 = arith.constant dense<0.000000e+00> : vector<8xf32>
    %50 = vector.multi_reduction <add>, %49, %cst_20 [1] : vector<8x8xf32> to vector<8xf32>
    %51 = vector.shape_cast %50 : vector<8xf32> to vector<8x1xf32>
    %52 = tpu.reciprocal %51 {approx = true} : vector<8x1xf32> -> vector<8x1xf32>
    %53 = vector.broadcast %52 : vector<8x1xf32> to vector<8x8xf32>
    %54 = arith.mulf %49, %53 : vector<8x8xf32>
    %cst_21 = arith.constant dense<0.000000e+00> : vector<8x8xf32>
    %55 = tpu.matmul %54, %43, %cst_21 {dimension_numbers = #tpu.dot_dimension_numbers<[1], [0], [0], [1], [0, 0, 1, 1], [], []>} : vector<8x8xf32>, vector<8x8xf32>, vector<8x8xf32> -> vector<8x8xf32>
    %56 = vector.extract_strided_slice %8 {offsets = [0, 24], sizes = [8, 8], strides = [1, 1]} : vector<8x32xf32> to vector<8x8xf32>
    %57 = vector.extract_strided_slice %9 {offsets = [0, 24], sizes = [8, 8], strides = [1, 1]} : vector<8x32xf32> to vector<8x8xf32>
    %58 = vector.extract_strided_slice %10 {offsets = [0, 24], sizes = [8, 8], strides = [1, 1]} : vector<8x32xf32> to vector<8x8xf32>
    %cst_22 = arith.constant dense<0.000000e+00> : vector<8x8xf32>
    %59 = tpu.matmul %56, %57, %cst_22 {dimension_numbers = #tpu.dot_dimension_numbers<[1], [1], [0], [0], [0, 0, 1, 0], [], []>} : vector<8x8xf32>, vector<8x8xf32>, vector<8x8xf32> -> vector<8x8xf32>
    %cst_23 = arith.constant dense<0xFF800000> : vector<8xf32>
    %60 = vector.multi_reduction <maximumf>, %59, %cst_23 [1] : vector<8x8xf32> to vector<8xf32>
    %61 = vector.shape_cast %60 : vector<8xf32> to vector<8x1xf32>
    %62 = vector.broadcast %61 : vector<8x1xf32> to vector<8x8xf32>
    %63 = arith.subf %59, %62 : vector<8x8xf32>
    %64 = math.exp %63 : vector<8x8xf32>
    %cst_24 = arith.constant dense<0.000000e+00> : vector<8xf32>
    %65 = vector.multi_reduction <add>, %64, %cst_24 [1] : vector<8x8xf32> to vector<8xf32>
    %66 = vector.shape_cast %65 : vector<8xf32> to vector<8x1xf32>
    %67 = tpu.reciprocal %66 {approx = true} : vector<8x1xf32> -> vector<8x1xf32>
    %68 = vector.broadcast %67 : vector<8x1xf32> to vector<8x8xf32>
    %69 = arith.mulf %64, %68 : vector<8x8xf32>
    %cst_25 = arith.constant dense<0.000000e+00> : vector<8x8xf32>
    %70 = tpu.matmul %69, %58, %cst_25 {dimension_numbers = #tpu.dot_dimension_numbers<[1], [0], [0], [1], [0, 0, 1, 1], [], []>} : vector<8x8xf32>, vector<8x8xf32>, vector<8x8xf32> -> vector<8x8xf32>
    %71 = tpu.concatenate %25, %40, %55, %70 in 1 : vector<8x8xf32>, vector<8x8xf32>, vector<8x8xf32>, vector<8x8xf32> -> vector<8x32xf32>
    %c0_26 = arith.constant 0 : index
    %c0_27 = arith.constant 0 : index
    %c0_28 = arith.constant 0 : index
    %72 = vector.load %arg6[%c0_26, %c0_27, %c0_28] : memref<1x8x32xf32, #tpu.memory_space<vmem>>, vector<1x8x32xf32>
    %73 = vector.shape_cast %72 : vector<1x8x32xf32> to vector<8x32xf32>
    %74 = vector.shape_cast %71 : vector<8x32xf32> to vector<1x8x32xf32>
    tpu.vector_store %arg6[%c0_26, %c0_27, %c0_28], %74 {strides = array<i32>} : memref<1x8x32xf32, #tpu.memory_space<vmem>>, vector<1x8x32xf32>,
    return
  }
  func.func @transform_0(%arg0: i32, %arg1: i32) -> (i32, i32, i32) {
    %c0_i32 = arith.constant 0 : i32
    %c0_i32_0 = arith.constant 0 : i32
    %c0_i32_1 = arith.constant 0 : i32
    return %arg0, %c0_i32, %c0_i32_0 : i32, i32, i32
  }
  func.func @transform_1(%arg0: i32, %arg1: i32) -> (i32, i32) {
    %c0_i32 = arith.constant 0 : i32
    %c0_i32_0 = arith.constant 0 : i32
    %c0_i32_1 = arith.constant 0 : i32
    return %c0_i32, %c0_i32_0 : i32, i32
  }
  func.func @transform_2(%arg0: i32, %arg1: i32) -> (i32, i32) {
    %c0_i32 = arith.constant 0 : i32
    %c0_i32_0 = arith.constant 0 : i32
    %c0_i32_1 = arith.constant 0 : i32
    return %c0_i32, %c0_i32_0 : i32, i32
  }
  func.func @transform_3(%arg0: i32, %arg1: i32) -> (i32, i32) {
    %c0_i32 = arith.constant 0 : i32
    %c0_i32_0 = arith.constant 0 : i32
    %c0_i32_1 = arith.constant 0 : i32
    return %c0_i32, %c0_i32_0 : i32, i32
  }
  func.func @transform_4(%arg0: i32, %arg1: i32) -> (i32, i32, i32) {
    %c0_i32 = arith.constant 0 : i32
    %c0_i32_0 = arith.constant 0 : i32
    return %arg0, %arg1, %c0_i32 : i32, i32, i32
  }
}

</mosaic_0001>

<llo_original>
// kernel: tpu_custom_call.1
$region0: #{tpu_custom_call.1}
  #allocation0 [shape = 'u32[]', space=smem, size = 0x4, offset = 0x4, fixed_abs, tag = 'smem constant byte address 0x4 - core index']
  #allocation1 [shape = 'u32[144,128]{1,0:T(1,128)}', space=vmem, size = 0x12000, scoped, tag = 'internal scratch']
  #allocation2 [shape = 'f32[8,32]{1,0:T(8,128)}', space=vmem, size = 0x1000, scoped, tag = 'scratch operand']
  #allocation3 [shape = 'f32[8,32]{1,0:T(8,128)}', space=vmem, size = 0x1000, scoped, tag = 'scratch operand']
  %s0 = inlined_call_operand.hbm [shape: f32[2,8,32], index: 0, kind: input, shape index: {}]
  %s1 = inlined_call_operand.hbm [shape: f32[32,32], index: 1, kind: input, shape index: {}]
  %s2 = inlined_call_operand.hbm [shape: f32[32,32], index: 2, kind: input, shape index: {}]
  %s3 = inlined_call_operand.hbm [shape: f32[32,32], index: 3, kind: input, shape index: {}]
  %s4 = inlined_call_operand.hbm [shape: f32[2,8,32], index: 4, kind: output, shape index: {}]
  %s5 = sld [smem:[#allocation0]]
  $region69: #{tpu_custom_call.1} parent=0
    _
  %s7 = ssub.s32 1, %s5
  %s8 = scalar_select 0, %s7, %s5
  $region1: #{tpu_custom_call.1} parent=0
    #allocation4 [shape = 'u8[8192]{0}', space=vmem, size = 0x2000, scoped, tag = 'input window, operand 0']
    #allocation5 [shape = 's32[2]{0}', space=sflag, size = 0x8, scoped, tag = 'scoped memory for tpu_custom_call.1']
    #allocation6 [shape = 's32[2]{0}', space=sflag, size = 0x8, scoped, tag = 'scoped memory for tpu_custom_call.1']
    #allocation7 [shape = 'u8[16384]{0}', space=vmem, size = 0x4000, scoped, tag = 'input window, operand 1, single buffered']
    #allocation8 [shape = 's32[1]{0}', space=sflag, size = 0x4, scoped, tag = 'scoped memory for tpu_custom_call.1']
    #allocation9 [shape = 'u8[16384]{0}', space=vmem, size = 0x4000, scoped, tag = 'input window, operand 2, single buffered']
    #allocation10 [shape = 'u8[16384]{0}', space=vmem, size = 0x4000, scoped, tag = 'input window, operand 3, single buffered']
    #allocation11 [shape = 's32[1]{0}', space=sflag, size = 0x4, scoped, tag = 'scoped memory for tpu_custom_call.1']
    #allocation12 [shape = 'u8[8192]{0}', space=vmem, size = 0x2000, scoped, tag = 'output window, operand 0']
    %9 = vsyncpa [#allocation5], 0
    %s10 = scalar_lea.sflag [#allocation5], 1
    %11 = vsyncpa %s10, 0
    %12 = vsyncpa [#allocation8], 0
    %13 = vsyncpa [#allocation11], 0
    %14 = vsyncpa [#allocation6], 0
    %s15 = scalar_lea.sflag [#allocation6], 1
    %16 = vsyncpa %s15, 0
    loop: start=0, step=1, limit=4
    $region2: #{tpu_custom_call.1} parent=1 // loop_pre_header
      _
    $region3: #{tpu_custom_call.1} parent=1 // loop_header
      %s18 = sphi 0, %s22
      %p19 = scmp.ge.s32.totalorder %s18, 4
      %s25 = sphi 0, %s37
      %s26 = sphi 0, %s33
      %s27 = sphi 0, %s25
      %s28 = sphi 0, %s26
      %s29 = sphi 0, %s27
      %s30 = sphi 0, %s28
      %s40 = sphi 0, %s42
      %s43 = sphi 0, %s40
      %s44 = sphi 0, %s43
      %s60 = sphi 0, %s44
      %s64 = sphi 0, %s64
      %s66 = sphi 0, %s64
      %s67 = sphi 0, %s66
      %s81 = sphi 0, %s67
      %s85 = sphi 0, %s85
      %s87 = sphi 0, %s85
      %s88 = sphi 0, %s87
      %s102 = sphi 0, %s88
      %s106 = sphi 0, %s106
      %s108 = sphi 0, %s106
      %s109 = sphi 0, %s108
      %s123 = sphi 0, %s109
      %s131 = sphi 0, %s133
      %s134 = sphi 0, %s131
      %s135 = sphi 0, %s134
      %s151 = sphi 0, %s135
    $region4: #{tpu_custom_call.1} parent=1 // loop_header_branch
      %21 = sbr.rel (%p19) target = $region8
    $region5: #{tpu_custom_call.1} parent=1 // loop_body
      %s23 = ssub.s32 %s18, 1
      %s24 = ssub.s32 %s18, 2
      %s31 = sadd.s32 1, %s26
      %p32 = scmp.ge.s32.totalorder %s31, 1
      %s33 = scalar_select %p32, 0, %s31
      %s34 = sadd.s32 1, %s25
      %s35 = scalar_select %p32, %s34, %s25
      %p36 = scmp.ge.s32.totalorder %s35, 2
      %s37 = scalar_select %p36, 0, %s35
      %s38 = ssub.s32 %s25, %s37
      %p39 = scmp.eq.s32.totalorder %s38, 0
      %s41 = sadd.s32 %s40, 1
      %s42 = scalar_select %p39, %s40, %s41
      %p45 = pneg %p39
      %p46 = scmp.eq.s32.totalorder %s18, 1
      %p47 = por %p45, %p46
      %p48 = scmp.ne.s32.totalorder %s40, %s43
      %p49 = scmp.eq.s32.totalorder %s18, 0
      %p50 = por %p48, %p49
      %p51 = scmp.ne.s32.totalorder %s40, %s43
      %p52 = scmp.eq.s32.totalorder %s23, 1
      %p53 = por %p51, %p52
      %p54 = scmp.ne.s32.totalorder %s43, %s44
      %p55 = scmp.eq.s32.totalorder %s23, 0
      %p56 = por %p54, %p55
      %p57 = scmp.ne.s32.totalorder %s43, %s44
      %p58 = scmp.eq.s32.totalorder %s24, 1
      %p59 = por %p57, %p58
      %p61 = scmp.ne.s32.totalorder %s44, %s60
      %p62 = scmp.eq.s32.totalorder %s24, 0
      %p63 = por %p61, %p62
      %s65 = sadd.s32 %s64, 1
      %p68 = scmp.eq.s32.totalorder %s18, 1
      %p69 = scmp.ne.s32.totalorder %s64, %s66
      %p70 = scmp.eq.s32.totalorder %s18, 0
      %p71 = por %p69, %p70
      %p72 = scmp.ne.s32.totalorder %s64, %s66
      %p73 = scmp.eq.s32.totalorder %s23, 1
      %p74 = por %p72, %p73
      %p75 = scmp.ne.s32.totalorder %s66, %s67
      %p76 = scmp.eq.s32.totalorder %s23, 0
      %p77 = por %p75, %p76
      %p78 = scmp.ne.s32.totalorder %s66, %s67
      %p79 = scmp.eq.s32.totalorder %s24, 1
      %p80 = por %p78, %p79
      %p82 = scmp.ne.s32.totalorder %s67, %s81
      %p83 = scmp.eq.s32.totalorder %s24, 0
      %p84 = por %p82, %p83
      %s86 = sadd.s32 %s85, 1
      %p89 = scmp.eq.s32.totalorder %s18, 1
      %p90 = scmp.ne.s32.totalorder %s85, %s87
      %p91 = scmp.eq.s32.totalorder %s18, 0
      %p92 = por %p90, %p91
      %p93 = scmp.ne.s32.totalorder %s85, %s87
      %p94 = scmp.eq.s32.totalorder %s23, 1
      %p95 = por %p93, %p94
      %p96 = scmp.ne.s32.totalorder %s87, %s88
      %p97 = scmp.eq.s32.totalorder %s23, 0
      %p98 = por %p96, %p97
      %p99 = scmp.ne.s32.totalorder %s87, %s88
      %p100 = scmp.eq.s32.totalorder %s24, 1
      %p101 = por %p99, %p100
      %p103 = scmp.ne.s32.totalorder %s88, %s102
      %p104 = scmp.eq.s32.totalorder %s24, 0
      %p105 = por %p103, %p104
      %s107 = sadd.s32 %s106, 1
      %p110 = scmp.eq.s32.totalorder %s18, 1
      %p111 = scmp.ne.s32.totalorder %s106, %s108
      %p112 = scmp.eq.s32.totalorder %s18, 0
      %p113 = por %p111, %p112
      %p114 = scmp.ne.s32.totalorder %s106, %s108
      %p115 = scmp.eq.s32.totalorder %s23, 1
      %p116 = por %p114, %p115
      %p117 = scmp.ne.s32.totalorder %s108, %s109
      %p118 = scmp.eq.s32.totalorder %s23, 0
      %p119 = por %p117, %p118
      %p120 = scmp.ne.s32.totalorder %s108, %s109
      %p121 = scmp.eq.s32.totalorder %s24, 1
      %p122 = por %p120, %p121
      %p124 = scmp.ne.s32.totalorder %s109, %s123
      %p125 = scmp.eq.s32.totalorder %s24, 0
      %p126 = por %p124, %p125
      %s127 = ssub.s32 %s25, %s37
      %s128 = ssub.s32 %s26, %s33
      %s129 = sor.u32 %s127, %s128
      %p130 = scmp.eq.s32.totalorder %s129, 0
      %s132 = sadd.s32 %s131, 1
      %s133 = scalar_select %p130, %s131, %s132
      %p136 = pneg %p130
      %p137 = scmp.eq.s32.totalorder %s18, 1
      %p138 = por %p136, %p137
      %p139 = scmp.ne.s32.totalorder %s131, %s134
      %p140 = scmp.eq.s32.totalorder %s18, 0
      %p141 = por %p139, %p140
      %p142 = scmp.ne.s32.totalorder %s131, %s134
      %p143 = scmp.eq.s32.totalorder %s23, 1
      %p144 = por %p142, %p143
      %p145 = scmp.ne.s32.totalorder %s134, %s135
      %p146 = scmp.eq.s32.totalorder %s23, 0
      %p147 = por %p145, %p146
      %p148 = scmp.ne.s32.totalorder %s134, %s135
      %p149 = scmp.eq.s32.totalorder %s24, 1
      %p150 = por %p148, %p149
      %p152 = scmp.ne.s32.totalorder %s135, %s151
      %p153 = scmp.eq.s32.totalorder %s24, 0
      %p154 = por %p152, %p153
      %p155 = scmp.le.s32.totalorder 1, %s18
      %p156 = scmp.lt.s32.totalorder %s18, 3
      %p157 = pnand %p155, %p156
      %p158 = pneg %p157
      // Predicated region
      $region9: #{tpu_custom_call.1} parent=5 // pred_check
        _
      $region10: #{tpu_custom_call.1} parent=5 // pred_check_branch
        %160 = sbr.rel (%p157) target = $region12
      $region11: #{tpu_custom_call.1} parent=5 // pred_region
        %s161 = ssub.s32 %s18, 1
        // Predicated region
        $region13: #{tpu_custom_call.1} parent=11 // pred_check
          %p162 = pneg %p77
        $region14: #{tpu_custom_call.1} parent=11 // pred_check_branch
          %164 = sbr.rel (%p162) target = $region16
        $region15: #{tpu_custom_call.1} parent=11 // pred_region
          %s166 = ssub.s32 512, 512
          %167 = vsyncadd [#allocation8], %s166
          %s168 = sshll.u32 [#allocation7], 4
          %s169 = int_to_ptr.vmem [resolvable:$true] %s168
          %174 = dma.hbm_to_vmem [thread:$0]  %s1, 512, %s169, [#allocation8], 128, 128, 8
        $region16: #{tpu_custom_call.1} parent=11 // pred_fallthru
          _
        // Predicated region
        $region17: #{tpu_custom_call.1} parent=11 // pred_check
          %p175 = pneg %p98
        $region18: #{tpu_custom_call.1} parent=11 // pred_check_branch
          %177 = sbr.rel (%p175) target = $region20
        $region19: #{tpu_custom_call.1} parent=11 // pred_region
          %s179 = ssub.s32 512, 512
          %180 = vsyncadd [#allocation8], %s179
          %s181 = sshll.u32 [#allocation9], 4
          %s182 = int_to_ptr.vmem [resolvable:$true] %s181
          %187 = dma.hbm_to_vmem [thread:$0]  %s2, 512, %s182, [#allocation8], 128, 128, 8
        $region20: #{tpu_custom_call.1} parent=11 // pred_fallthru
          _
        // Predicated region
        $region21: #{tpu_custom_call.1} parent=11 // pred_check
          %p188 = pneg %p119
        $region22: #{tpu_custom_call.1} parent=11 // pred_check_branch
          %190 = sbr.rel (%p188) target = $region24
        $region23: #{tpu_custom_call.1} parent=11 // pred_region
          %s192 = ssub.s32 512, 512
          %193 = vsyncadd [#allocation11], %s192
          %s194 = sshll.u32 [#allocation10], 4
          %s195 = int_to_ptr.vmem [resolvable:$true] %s194
          %200 = dma.hbm_to_vmem [thread:$0]  %s3, 512, %s195, [#allocation11], 128, 128, 8
        $region24: #{tpu_custom_call.1} parent=11 // pred_fallthru
          _
      $region12: #{tpu_custom_call.1} parent=5 // pred_fallthru
        _
      %p201 = scmp.lt.s32.totalorder %s18, 2
      // Predicated region
      $region25: #{tpu_custom_call.1} parent=5 // pred_check
        %p202 = pneg %p201
      $region26: #{tpu_custom_call.1} parent=5 // pred_check_branch
        %204 = sbr.rel (%p202) target = $region28
      $region27: #{tpu_custom_call.1} parent=5 // pred_region
        // Predicated region
        $region29: #{tpu_custom_call.1} parent=27 // pred_check
          %p205 = pneg %p50
        $region30: #{tpu_custom_call.1} parent=27 // pred_check_branch
          %207 = sbr.rel (%p205) target = $region32
        $region31: #{tpu_custom_call.1} parent=27 // pred_region
          %s208 = sand.u32 %s40, 1
          %s209 = scalar_lea.sflag [#allocation5], %s208
          %s210 = sand.u32 %s40, 1
          %s211 = smul.addr %s210, 8
          %s212 = scalar_lea.vmem [#allocation4], %s211
          %s214 = ssub.s32 128, 128
          %215 = vsyncadd %s209, %s214
          %s216 = smul.addr %s25, 128
          %s217 = scalar_lea.hbm %s0, %s216
          %s219 = sshll.u32 %s212, 4
          %s220 = int_to_ptr.vmem [resolvable:$true] %s219
          %222 = dma.hbm_to_vmem [thread:$0]  %s217, 128, %s220, %s209
        $region32: #{tpu_custom_call.1} parent=27 // pred_fallthru
          _
      $region28: #{tpu_custom_call.1} parent=5 // pred_fallthru
        _
      %p223 = scmp.le.s32.totalorder 1, %s18
      %p224 = scmp.lt.s32.totalorder %s18, 3
      %p225 = pnand %p223, %p224
      %p226 = pneg %p225
      // Predicated region
      $region33: #{tpu_custom_call.1} parent=5 // pred_check
        _
      $region34: #{tpu_custom_call.1} parent=5 // pred_check_branch
        %228 = sbr.rel (%p225) target = $region36
      $region35: #{tpu_custom_call.1} parent=5 // pred_region
        %s229 = ssub.s32 %s18, 1
        %s230 = sand.u32 %s43, 1
        %s231 = scalar_lea.sflag [#allocation5], %s230
        %s232 = sand.u32 %s43, 1
        %s233 = smul.addr %s232, 8
        %s234 = scalar_lea.vmem [#allocation4], %s233
        // Predicated region
        $region37: #{tpu_custom_call.1} parent=35 // pred_check
          %p235 = pneg %p56
        $region38: #{tpu_custom_call.1} parent=35 // pred_check_branch
          %237 = sbr.rel (%p235) target = $region40
        $region39: #{tpu_custom_call.1} parent=35 // pred_region
          %238 = dma.done %s231, 128
        $region40: #{tpu_custom_call.1} parent=35 // pred_fallthru
          _
        // Predicated region
        $region41: #{tpu_custom_call.1} parent=35 // pred_check
          %p239 = pneg %p77
        $region42: #{tpu_custom_call.1} parent=35 // pred_check_branch
          %241 = sbr.rel (%p239) target = $region44
        $region43: #{tpu_custom_call.1} parent=35 // pred_region
          %242 = dma.done [#allocation8], 512
        $region44: #{tpu_custom_call.1} parent=35 // pred_fallthru
          _
        // Predicated region
        $region45: #{tpu_custom_call.1} parent=35 // pred_check
          %p243 = pneg %p98
        $region46: #{tpu_custom_call.1} parent=35 // pred_check_branch
          %245 = sbr.rel (%p243) target = $region48
        $region47: #{tpu_custom_call.1} parent=35 // pred_region
          %246 = dma.done [#allocation8], 512
        $region48: #{tpu_custom_call.1} parent=35 // pred_fallthru
          _
        // Predicated region
        $region49: #{tpu_custom_call.1} parent=35 // pred_check
          %p247 = pneg %p119
        $region50: #{tpu_custom_call.1} parent=35 // pred_check_branch
          %249 = sbr.rel (%p247) target = $region52
        $region51: #{tpu_custom_call.1} parent=35 // pred_region
          %250 = dma.done [#allocation11], 512
        $region52: #{tpu_custom_call.1} parent=35 // pred_fallthru
          _
        %s251 = sand.u32 %s43, 1
        %s252 = scalar_lea.sflag [#allocation5], %s251
        %s253 = sand.u32 %s43, 1
        %s254 = smul.addr %s253, 8
        %s255 = scalar_lea.vmem [#allocation4], %s254
        %p256 = pneg %p56
        %p257 = pneg %p53
        %p258 = pneg %p77
        %p259 = pneg %p74
        %p260 = pneg %p98
        %p261 = pneg %p95
        %p262 = pneg %p119
        %p263 = pneg %p116
        %p264 = pneg %p147
        %p265 = pneg %p144
        %s266 = sand.u32 %s134, 1
        %s267 = scalar_lea.sflag [#allocation6], %s266
        %s268 = sand.u32 %s134, 1
        %s269 = smul.addr %s268, 8
        %s270 = scalar_lea.vmem [#allocation12], %s269
        %p271 = scmp.eq.s32.totalorder %s28, 0
        // Predicated region
        $region53: #{tpu_custom_call.1} parent=35 // pred_check
          %p272 = pneg %p271
        $region54: #{tpu_custom_call.1} parent=35 // pred_check_branch
          %274 = sbr.rel (%p272) target = $region56
        $region55: #{tpu_custom_call.1} parent=35 // pred_region
          %v275 = vld [vmem:[%s234] sm:$0xff]
          %v276 = vld [vmem:[#allocation9] sm:$0xff]
          %v277 = vld [vmem:[#allocation9 + $0x8] sm:$0xff]
          %v278 = vld [vmem:[#allocation9 + $0x10] sm:$0xff]
          %v279 = vld [vmem:[#allocation9 + $0x18] sm:$0xff]
          %vm280 = vcmask 261120
          %v282 = vsel %vm280, %v275, 0
          %284 = vmatprep.subr.mxu0 0.0
          %285 = vmatpush1.msra.mxu0 0.0
          %286 = vmatprep.subr.mxu0 0.0
          %287 = vmatpush1.msra.mxu0 0.0
          %288 = vmatprep.subr.mxu0 0.0
          %289 = vmatpush1.msra.mxu0 0.0
          %290 = vmatprep.subr.mxu0 0.0
          %291 = vmatpush1.msra.mxu0 0.0
          %292 = vmatprep.subr.mxu0 0.0
          %293 = vmatpush1.msra.mxu0 0.0
          %294 = vmatprep.subr.mxu0 0.0
          %295 = vmatpush1.msra.mxu0 0.0
          %296 = vmatprep.subr.mxu0 0.0
          %297 = vmatpush1.msra.mxu0 0.0
          %298 = vmatprep.subr.mxu0 0.0
          %299 = vmatpush1.msra.mxu0 0.0
          %300 = vmatprep.subr.mxu0 0.0
          %301 = vmatpush1.msra.mxu0 0.0
          %302 = vmatprep.subr.mxu0 0.0
          %303 = vmatpush1.msra.mxu0 0.0
          %304 = vmatprep.subr.mxu0 0.0
          %305 = vmatpush1.msra.mxu0 0.0
          %306 = vmatprep.subr.mxu0 0.0
          %307 = vmatpush1.msra.mxu0 0.0
          %308 = vmatprep.subr.mxu0 0.0
          %309 = vmatpush1.msra.mxu0 %v279
          %310 = vmatprep.subr.mxu0 0.0
          %311 = vmatpush1.msra.mxu0 %v278
          %312 = vmatprep.subr.mxu0 0.0
          %313 = vmatpush1.msra.mxu0 %v277
          %314 = vmatprep.subr.mxu0 0.0
          %315 = vmatpush1.msra.mxu0 %v276
          %316 = vmatprep.subr.mxu0 0.0
          %317 = vmatpush2.msra.mxu0 0.0
          %318 = vmatprep.subr.mxu0 0.0
          %319 = vmatpush2.msra.mxu0 0.0
          %320 = vmatprep.subr.mxu0 0.0
          %321 = vmatpush2.msra.mxu0 0.0
          %322 = vmatprep.subr.mxu0 0.0
          %323 = vmatpush2.msra.mxu0 0.0
          %324 = vmatprep.subr.mxu0 0.0
          %325 = vmatpush2.msra.mxu0 0.0
          %326 = vmatprep.subr.mxu0 0.0
          %327 = vmatpush2.msra.mxu0 0.0
          %328 = vmatprep.subr.mxu0 0.0
          %329 = vmatpush2.msra.mxu0 0.0
          %330 = vmatprep.subr.mxu0 0.0
          %331 = vmatpush2.msra.mxu0 0.0
          %332 = vmatprep.subr.mxu0 0.0
          %333 = vmatpush2.msra.mxu0 0.0
          %334 = vmatprep.subr.mxu0 0.0
          %335 = vmatpush2.msra.mxu0 0.0
          %336 = vmatprep.subr.mxu0 0.0
          %337 = vmatpush2.msra.mxu0 0.0
          %338 = vmatprep.subr.mxu0 0.0
          %339 = vmatpush2.msra.mxu0 0.0
          %340 = vmatprep.subr.mxu0 0.0
          %341 = vmatpush2.msra.mxu0 0.0
          %342 = vmatprep.subr.mxu0 0.0
          %343 = vmatpush2.msra.mxu0 0.0
          %344 = vmatprep.subr.mxu0 0.0
          %345 = vmatpush2.msra.mxu0 0.0
          %346 = vmatprep.subr.mxu0 0.0
          %347 = vmatpush2.msra.mxu0 0.0
          %348 = vmatprep.mubr.f32.mxu0 0.0
          %349 = vmatmul.mubr.f32.gmra.mxu0 %v282
          %v350 = vpop.f32.mrf.mxu0
          %v351 = vadd.f32 0.0, %v350
          %v352 = vpop.f32.mrf.mxu0
          %353 = vdwg.mxu0
          %354 = vst.msk [vmem:[#allocation2] sm:$0xff] %vm280, %v351
          %v355 = vld [vmem:[#allocation10] sm:$0xff]
          %v356 = vld [vmem:[#allocation10 + $0x8] sm:$0xff]
          %v357 = vld [vmem:[#allocation10 + $0x10] sm:$0xff]
          %v358 = vld [vmem:[#allocation10 + $0x18] sm:$0xff]
          %359 = vmatprep.subr.mxu0 0.0
          %360 = vmatpush1.msra.mxu0 0.0
          %361 = vmatprep.subr.mxu0 0.0
          %362 = vmatpush1.msra.mxu0 0.0
          %363 = vmatprep.subr.mxu0 0.0
          %364 = vmatpush1.msra.mxu0 0.0
          %365 = vmatprep.subr.mxu0 0.0
          %366 = vmatpush1.msra.mxu0 0.0
          %367 = vmatprep.subr.mxu0 0.0
          %368 = vmatpush1.msra.mxu0 0.0
          %369 = vmatprep.subr.mxu0 0.0
          %370 = vmatpush1.msra.mxu0 0.0
          %371 = vmatprep.subr.mxu0 0.0
          %372 = vmatpush1.msra.mxu0 0.0
          %373 = vmatprep.subr.mxu0 0.0
          %374 = vmatpush1.msra.mxu0 0.0
          %375 = vmatprep.subr.mxu0 0.0
          %376 = vmatpush1.msra.mxu0 0.0
          %377 = vmatprep.subr.mxu0 0.0
          %378 = vmatpush1.msra.mxu0 0.0
          %379 = vmatprep.subr.mxu0 0.0
          %380 = vmatpush1.msra.mxu0 0.0
          %381 = vmatprep.subr.mxu0 0.0
          %382 = vmatpush1.msra.mxu0 0.0
          %383 = vmatprep.subr.mxu0 0.0
          %384 = vmatpush1.msra.mxu0 %v358
          %385 = vmatprep.subr.mxu0 0.0
          %386 = vmatpush1.msra.mxu0 %v357
          %387 = vmatprep.subr.mxu0 0.0
          %388 = vmatpush1.msra.mxu0 %v356
          %389 = vmatprep.subr.mxu0 0.0
          %390 = vmatpush1.msra.mxu0 %v355
          %391 = vmatprep.subr.mxu0 0.0
          %392 = vmatpush2.msra.mxu0 0.0
          %393 = vmatprep.subr.mxu0 0.0
          %394 = vmatpush2.msra.mxu0 0.0
          %395 = vmatprep.subr.mxu0 0.0
          %396 = vmatpush2.msra.mxu0 0.0
          %397 = vmatprep.subr.mxu0 0.0
          %398 = vmatpush2.msra.mxu0 0.0
          %399 = vmatprep.subr.mxu0 0.0
          %400 = vmatpush2.msra.mxu0 0.0
          %401 = vmatprep.subr.mxu0 0.0
          %402 = vmatpush2.msra.mxu0 0.0
          %403 = vmatprep.subr.mxu0 0.0
          %404 = vmatpush2.msra.mxu0 0.0
          %405 = vmatprep.subr.mxu0 0.0
          %406 = vmatpush2.msra.mxu0 0.0
          %407 = vmatprep.subr.mxu0 0.0
          %408 = vmatpush2.msra.mxu0 0.0
          %409 = vmatprep.subr.mxu0 0.0
          %410 = vmatpush2.msra.mxu0 0.0
          %411 = vmatprep.subr.mxu0 0.0
          %412 = vmatpush2.msra.mxu0 0.0
          %413 = vmatprep.subr.mxu0 0.0
          %414 = vmatpush2.msra.mxu0 0.0
          %415 = vmatprep.subr.mxu0 0.0
          %416 = vmatpush2.msra.mxu0 0.0
          %417 = vmatprep.subr.mxu0 0.0
          %418 = vmatpush2.msra.mxu0 0.0
          %419 = vmatprep.subr.mxu0 0.0
          %420 = vmatpush2.msra.mxu0 0.0
          %421 = vmatprep.subr.mxu0 0.0
          %422 = vmatpush2.msra.mxu0 0.0
          %423 = vmatprep.mubr.f32.mxu0 0.0
          %424 = vmatmul.mubr.f32.gmra.mxu0 %v282
          %v425 = vpop.f32.mrf.mxu0
          %v426 = vadd.f32 0.0, %v425
          %v427 = vpop.f32.mrf.mxu0
          %428 = vdwg.mxu0
          %429 = vst.msk [vmem:[#allocation3] sm:$0xff] %vm280, %v426
        $region56: #{tpu_custom_call.1} parent=35 // pred_fallthru
          _
        %v430 = vld [vmem:[%s234] sm:$0xff]
        %v431 = vld [vmem:[#allocation7] sm:$0xff]
        %v432 = vld [vmem:[#allocation7 + $0x8] sm:$0xff]
        %v433 = vld [vmem:[#allocation7 + $0x10] sm:$0xff]
        %v434 = vld [vmem:[#allocation7 + $0x18] sm:$0xff]
        %vm435 = vcmask 261120
        %v437 = vsel %vm435, %v430, 0
        %439 = vmatprep.subr.mxu0 0.0
        %440 = vmatpush1.msra.mxu0 0.0
        %441 = vmatprep.subr.mxu0 0.0
        %442 = vmatpush1.msra.mxu0 0.0
        %443 = vmatprep.subr.mxu0 0.0
        %444 = vmatpush1.msra.mxu0 0.0
        %445 = vmatprep.subr.mxu0 0.0
        %446 = vmatpush1.msra.mxu0 0.0
        %447 = vmatprep.subr.mxu0 0.0
        %448 = vmatpush1.msra.mxu0 0.0
        %449 = vmatprep.subr.mxu0 0.0
        %450 = vmatpush1.msra.mxu0 0.0
        %451 = vmatprep.subr.mxu0 0.0
        %452 = vmatpush1.msra.mxu0 0.0
        %453 = vmatprep.subr.mxu0 0.0
        %454 = vmatpush1.msra.mxu0 0.0
        %455 = vmatprep.subr.mxu0 0.0
        %456 = vmatpush1.msra.mxu0 0.0
        %457 = vmatprep.subr.mxu0 0.0
        %458 = vmatpush1.msra.mxu0 0.0
        %459 = vmatprep.subr.mxu0 0.0
        %460 = vmatpush1.msra.mxu0 0.0
        %461 = vmatprep.subr.mxu0 0.0
        %462 = vmatpush1.msra.mxu0 0.0
        %463 = vmatprep.subr.mxu0 0.0
        %464 = vmatpush1.msra.mxu0 %v434
        %465 = vmatprep.subr.mxu0 0.0
        %466 = vmatpush1.msra.mxu0 %v433
        %467 = vmatprep.subr.mxu0 0.0
        %468 = vmatpush1.msra.mxu0 %v432
        %469 = vmatprep.subr.mxu0 0.0
        %470 = vmatpush1.msra.mxu0 %v431
        %471 = vmatprep.subr.mxu0 0.0
        %472 = vmatpush2.msra.mxu0 0.0
        %473 = vmatprep.subr.mxu0 0.0
        %474 = vmatpush2.msra.mxu0 0.0
        %475 = vmatprep.subr.mxu0 0.0
        %476 = vmatpush2.msra.mxu0 0.0
        %477 = vmatprep.subr.mxu0 0.0
        %478 = vmatpush2.msra.mxu0 0.0
        %479 = vmatprep.subr.mxu0 0.0
        %480 = vmatpush2.msra.mxu0 0.0
        %481 = vmatprep.subr.mxu0 0.0
        %482 = vmatpush2.msra.mxu0 0.0
        %483 = vmatprep.subr.mxu0 0.0
        %484 = vmatpush2.msra.mxu0 0.0
        %485 = vmatprep.subr.mxu0 0.0
        %486 = vmatpush2.msra.mxu0 0.0
        %487 = vmatprep.subr.mxu0 0.0
        %488 = vmatpush2.msra.mxu0 0.0
        %489 = vmatprep.subr.mxu0 0.0
        %490 = vmatpush2.msra.mxu0 0.0
        %491 = vmatprep.subr.mxu0 0.0
        %492 = vmatpush2.msra.mxu0 0.0
        %493 = vmatprep.subr.mxu0 0.0
        %494 = vmatpush2.msra.mxu0 0.0
        %495 = vmatprep.subr.mxu0 0.0
        %496 = vmatpush2.msra.mxu0 0.0
        %497 = vmatprep.subr.mxu0 0.0
        %498 = vmatpush2.msra.mxu0 0.0
        %499 = vmatprep.subr.mxu0 0.0
        %500 = vmatpush2.msra.mxu0 0.0
        %501 = vmatprep.subr.mxu0 0.0
        %502 = vmatpush2.msra.mxu0 0.0
        %503 = vmatprep.mubr.f32.mxu0 0.0
        %504 = vmatmul.mubr.f32.gmra.mxu0 %v437
        %v505 = vpop.f32.mrf.mxu0
        %v506 = vadd.f32 0.0, %v505
        %v507 = vpop.f32.mrf.mxu0
        %508 = vdwg.mxu0
        %v509 = vmul.f32 %v506, 0.17677669
        %v510 = vld [vmem:[#allocation2] sm:$0xff]
        %v511 = vld [vmem:[#allocation3] sm:$0xff]
        %vm512 = vcmask 64512
        %v514 = vsel %vm512, %v509, 0
        %v517 = vsel %vm512, %v510, 0
        %519 = vmatprep.subr.mxu0 0.0
        %520 = vmatpush1.xpose.msra.mxu0 0.0
        %521 = vmatprep.subr.mxu0 0.0
        %522 = vmatpush1.xpose.msra.mxu0 0.0
        %523 = vmatprep.subr.mxu0 0.0
        %524 = vmatpush1.xpose.msra.mxu0 0.0
        %525 = vmatprep.subr.mxu0 0.0
        %526 = vmatpush1.xpose.msra.mxu0 0.0
        %527 = vmatprep.subr.mxu0 0.0
        %528 = vmatpush1.xpose.msra.mxu0 0.0
        %529 = vmatprep.subr.mxu0 0.0
        %530 = vmatpush1.xpose.msra.mxu0 0.0
        %531 = vmatprep.subr.mxu0 0.0
        %532 = vmatpush1.xpose.msra.mxu0 0.0
        %533 = vmatprep.subr.mxu0 0.0
        %534 = vmatpush1.xpose.msra.mxu0 0.0
        %535 = vmatprep.subr.mxu0 0.0
        %536 = vmatpush1.xpose.msra.mxu0 0.0
        %537 = vmatprep.subr.mxu0 0.0
        %538 = vmatpush1.xpose.msra.mxu0 0.0
        %539 = vmatprep.subr.mxu0 0.0
        %540 = vmatpush1.xpose.msra.mxu0 0.0
        %541 = vmatprep.subr.mxu0 0.0
        %542 = vmatpush1.xpose.msra.mxu0 0.0
        %543 = vmatprep.subr.mxu0 0.0
        %544 = vmatpush1.xpose.msra.mxu0 0.0
        %545 = vmatprep.subr.mxu0 0.0
        %546 = vmatpush1.xpose.msra.mxu0 0.0
        %547 = vmatprep.subr.mxu0 0.0
        %548 = vmatpush1.xpose.msra.mxu0 0.0
        %549 = vmatprep.subr.mxu0 0.0
        %550 = vmatpush1.xpose.msra.mxu0 %v517
        %551 = vmatprep.subr.mxu0 0.0
        %552 = vmatpush2.xpose.msra.mxu0 0.0
        %553 = vmatprep.subr.mxu0 0.0
        %554 = vmatpush2.xpose.msra.mxu0 0.0
        %555 = vmatprep.subr.mxu0 0.0
        %556 = vmatpush2.xpose.msra.mxu0 0.0
        %557 = vmatprep.subr.mxu0 0.0
        %558 = vmatpush2.xpose.msra.mxu0 0.0
        %559 = vmatprep.subr.mxu0 0.0
        %560 = vmatpush2.xpose.msra.mxu0 0.0
        %561 = vmatprep.subr.mxu0 0.0
        %562 = vmatpush2.xpose.msra.mxu0 0.0
        %563 = vmatprep.subr.mxu0 0.0
        %564 = vmatpush2.xpose.msra.mxu0 0.0
        %565 = vmatprep.subr.mxu0 0.0
        %566 = vmatpush2.xpose.msra.mxu0 0.0
        %567 = vmatprep.subr.mxu0 0.0
        %568 = vmatpush2.xpose.msra.mxu0 0.0
        %569 = vmatprep.subr.mxu0 0.0
        %570 = vmatpush2.xpose.msra.mxu0 0.0
        %571 = vmatprep.subr.mxu0 0.0
        %572 = vmatpush2.xpose.msra.mxu0 0.0
        %573 = vmatprep.subr.mxu0 0.0
        %574 = vmatpush2.xpose.msra.mxu0 0.0
        %575 = vmatprep.subr.mxu0 0.0
        %576 = vmatpush2.xpose.msra.mxu0 0.0
        %577 = vmatprep.subr.mxu0 0.0
        %578 = vmatpush2.xpose.msra.mxu0 0.0
        %579 = vmatprep.subr.mxu0 0.0
        %580 = vmatpush2.xpose.msra.mxu0 0.0
        %581 = vmatprep.subr.mxu0 0.0
        %582 = vmatpush2.xpose.msra.mxu0 0.0
        %583 = vmatprep.mubr.f32.mxu0 0.0
        %584 = vmatmul.mubr.f32.gmra.mxu0 %v514
        %v585 = vpop.f32.mrf.mxu0
        %v586 = vadd.f32 0.0, %v585
        %v587 = vpop.f32.mrf.mxu0
        %588 = vdwg.mxu0
        %v589 = vsel %vm512, %v586, -inf
        %590 = vmax.xlane.f32.xlu0 %v589
        %v591 = vpop.xlane.xlu0 %590
        %v592 = vsub.f32 %v586, %v591
        %v593 = vmul.f32 %v592, 1.442695
        %v594 = vpow.pop %v593
        %v595 = vsel %vm512, %v594, 0.0
        %596 = vadd.xlane.f32.xlu0 %v595
        %v597 = vpop.xlane.xlu0 %596
        %v598 = vrcp.pop %v597
        %v599 = vmul.f32 %v594, %v598
        %v601 = vsel %vm512, %v599, 0
        %603 = vmatprep.subr.mxu0 0.0
        %604 = vmatpush1.msra.mxu0 0.0
        %605 = vmatprep.subr.mxu0 0.0
        %606 = vmatpush1.msra.mxu0 0.0
        %607 = vmatprep.subr.mxu0 0.0
        %608 = vmatpush1.msra.mxu0 0.0
        %609 = vmatprep.subr.mxu0 0.0
        %610 = vmatpush1.msra.mxu0 0.0
        %611 = vmatprep.subr.mxu0 0.0
        %612 = vmatpush1.msra.mxu0 0.0
        %613 = vmatprep.subr.mxu0 0.0
        %614 = vmatpush1.msra.mxu0 0.0
        %615 = vmatprep.subr.mxu0 0.0
        %616 = vmatpush1.msra.mxu0 0.0
        %617 = vmatprep.subr.mxu0 0.0
        %618 = vmatpush1.msra.mxu0 0.0
        %619 = vmatprep.subr.mxu0 0.0
        %620 = vmatpush1.msra.mxu0 0.0
        %621 = vmatprep.subr.mxu0 0.0
        %622 = vmatpush1.msra.mxu0 0.0
        %623 = vmatprep.subr.mxu0 0.0
        %624 = vmatpush1.msra.mxu0 0.0
        %625 = vmatprep.subr.mxu0 0.0
        %626 = vmatpush1.msra.mxu0 0.0
        %627 = vmatprep.subr.mxu0 0.0
        %628 = vmatpush1.msra.mxu0 0.0
        %629 = vmatprep.subr.mxu0 0.0
        %630 = vmatpush1.msra.mxu0 0.0
        %631 = vmatprep.subr.mxu0 0.0
        %632 = vmatpush1.msra.mxu0 0.0
        %633 = vmatprep.subr.mxu0 0.0
        %634 = vmatpush1.msra.mxu0 %v511
        %635 = vmatprep.subr.mxu0 0.0
        %636 = vmatpush2.msra.mxu0 0.0
        %637 = vmatprep.subr.mxu0 0.0
        %638 = vmatpush2.msra.mxu0 0.0
        %639 = vmatprep.subr.mxu0 0.0
        %640 = vmatpush2.msra.mxu0 0.0
        %641 = vmatprep.subr.mxu0 0.0
        %642 = vmatpush2.msra.mxu0 0.0
        %643 = vmatprep.subr.mxu0 0.0
        %644 = vmatpush2.msra.mxu0 0.0
        %645 = vmatprep.subr.mxu0 0.0
        %646 = vmatpush2.msra.mxu0 0.0
        %647 = vmatprep.subr.mxu0 0.0
        %648 = vmatpush2.msra.mxu0 0.0
        %649 = vmatprep.subr.mxu0 0.0
        %650 = vmatpush2.msra.mxu0 0.0
        %651 = vmatprep.subr.mxu0 0.0
        %652 = vmatpush2.msra.mxu0 0.0
        %653 = vmatprep.subr.mxu0 0.0
        %654 = vmatpush2.msra.mxu0 0.0
        %655 = vmatprep.subr.mxu0 0.0
        %656 = vmatpush2.msra.mxu0 0.0
        %657 = vmatprep.subr.mxu0 0.0
        %658 = vmatpush2.msra.mxu0 0.0
        %659 = vmatprep.subr.mxu0 0.0
        %660 = vmatpush2.msra.mxu0 0.0
        %661 = vmatprep.subr.mxu0 0.0
        %662 = vmatpush2.msra.mxu0 0.0
        %663 = vmatprep.subr.mxu0 0.0
        %664 = vmatpush2.msra.mxu0 0.0
        %665 = vmatprep.subr.mxu0 0.0
        %666 = vmatpush2.msra.mxu0 0.0
        %667 = vmatprep.mubr.f32.mxu0 0.0
        %668 = vmatmul.mubr.f32.gmra.mxu0 %v601
        %v669 = vpop.f32.mrf.mxu0
        %v670 = vadd.f32 0.0, %v669
        %v671 = vpop.f32.mrf.mxu0
        %672 = vdwg.mxu0
        %673 = vrot.lane.b32.xlu0 %v509, 120
        %v674 = vpop.permute.xlu0 %673
        %675 = vrot.lane.b32.xlu0 %v510, 120
        %v676 = vpop.permute.xlu0 %675
        %v677 = vsel %vm512, %v674, 0
        %v679 = vsel %vm512, %v676, 0
        %681 = vmatprep.subr.mxu0 0.0
        %682 = vmatpush1.xpose.msra.mxu0 0.0
        %683 = vmatprep.subr.mxu0 0.0
        %684 = vmatpush1.xpose.msra.mxu0 0.0
        %685 = vmatprep.subr.mxu0 0.0
        %686 = vmatpush1.xpose.msra.mxu0 0.0
        %687 = vmatprep.subr.mxu0 0.0
        %688 = vmatpush1.xpose.msra.mxu0 0.0
        %689 = vmatprep.subr.mxu0 0.0
        %690 = vmatpush1.xpose.msra.mxu0 0.0
        %691 = vmatprep.subr.mxu0 0.0
        %692 = vmatpush1.xpose.msra.mxu0 0.0
        %693 = vmatprep.subr.mxu0 0.0
        %694 = vmatpush1.xpose.msra.mxu0 0.0
        %695 = vmatprep.subr.mxu0 0.0
        %696 = vmatpush1.xpose.msra.mxu0 0.0
        %697 = vmatprep.subr.mxu0 0.0
        %698 = vmatpush1.xpose.msra.mxu0 0.0
        %699 = vmatprep.subr.mxu0 0.0
        %700 = vmatpush1.xpose.msra.mxu0 0.0
        %701 = vmatprep.subr.mxu0 0.0
        %702 = vmatpush1.xpose.msra.mxu0 0.0
        %703 = vmatprep.subr.mxu0 0.0
        %704 = vmatpush1.xpose.msra.mxu0 0.0
        %705 = vmatprep.subr.mxu0 0.0
        %706 = vmatpush1.xpose.msra.mxu0 0.0
        %707 = vmatprep.subr.mxu0 0.0
        %708 = vmatpush1.xpose.msra.mxu0 0.0
        %709 = vmatprep.subr.mxu0 0.0
        %710 = vmatpush1.xpose.msra.mxu0 0.0
        %711 = vmatprep.subr.mxu0 0.0
        %712 = vmatpush1.xpose.msra.mxu0 %v679
        %713 = vmatprep.subr.mxu0 0.0
        %714 = vmatpush2.xpose.msra.mxu0 0.0
        %715 = vmatprep.subr.mxu0 0.0
        %716 = vmatpush2.xpose.msra.mxu0 0.0
        %717 = vmatprep.subr.mxu0 0.0
        %718 = vmatpush2.xpose.msra.mxu0 0.0
        %719 = vmatprep.subr.mxu0 0.0
        %720 = vmatpush2.xpose.msra.mxu0 0.0
        %721 = vmatprep.subr.mxu0 0.0
        %722 = vmatpush2.xpose.msra.mxu0 0.0
        %723 = vmatprep.subr.mxu0 0.0
        %724 = vmatpush2.xpose.msra.mxu0 0.0
        %725 = vmatprep.subr.mxu0 0.0
        %726 = vmatpush2.xpose.msra.mxu0 0.0
        %727 = vmatprep.subr.mxu0 0.0
        %728 = vmatpush2.xpose.msra.mxu0 0.0
        %729 = vmatprep.subr.mxu0 0.0
        %730 = vmatpush2.xpose.msra.mxu0 0.0
        %731 = vmatprep.subr.mxu0 0.0
        %732 = vmatpush2.xpose.msra.mxu0 0.0
        %733 = vmatprep.subr.mxu0 0.0
        %734 = vmatpush2.xpose.msra.mxu0 0.0
        %735 = vmatprep.subr.mxu0 0.0
        %736 = vmatpush2.xpose.msra.mxu0 0.0
        %737 = vmatprep.subr.mxu0 0.0
        %738 = vmatpush2.xpose.msra.mxu0 0.0
        %739 = vmatprep.subr.mxu0 0.0
        %740 = vmatpush2.xpose.msra.mxu0 0.0
        %741 = vmatprep.subr.mxu0 0.0
        %742 = vmatpush2.xpose.msra.mxu0 0.0
        %743 = vmatprep.subr.mxu0 0.0
        %744 = vmatpush2.xpose.msra.mxu0 0.0
        %745 = vmatprep.mubr.f32.mxu0 0.0
        %746 = vmatmul.mubr.f32.gmra.mxu0 %v677
        %v747 = vpop.f32.mrf.mxu0
        %v748 = vadd.f32 0.0, %v747
        %v749 = vpop.f32.mrf.mxu0
        %750 = vdwg.mxu0
        %v751 = vsel %vm512, %v748, -inf
        %752 = vmax.xlane.f32.xlu0 %v751
        %v753 = vpop.xlane.xlu0 %752
        %v754 = vsub.f32 %v748, %v753
        %v755 = vmul.f32 %v754, 1.442695
        %v756 = vpow.pop %v755
        %v757 = vsel %vm512, %v756, 0.0
        %758 = vadd.xlane.f32.xlu0 %v757
        %v759 = vpop.xlane.xlu0 %758
        %v760 = vrcp.pop %v759
        %v761 = vmul.f32 %v756, %v760
        %763 = vrot.lane.b32.xlu0 %v511, 120
        %v764 = vpop.permute.xlu0 %763
        %v767 = vsel %vm512, %v761, 0
        %769 = vmatprep.subr.mxu0 0.0
        %770 = vmatpush1.msra.mxu0 0.0
        %771 = vmatprep.subr.mxu0 0.0
        %772 = vmatpush1.msra.mxu0 0.0
        %773 = vmatprep.subr.mxu0 0.0
        %774 = vmatpush1.msra.mxu0 0.0
        %775 = vmatprep.subr.mxu0 0.0
        %776 = vmatpush1.msra.mxu0 0.0
        %777 = vmatprep.subr.mxu0 0.0
        %778 = vmatpush1.msra.mxu0 0.0
        %779 = vmatprep.subr.mxu0 0.0
        %780 = vmatpush1.msra.mxu0 0.0
        %781 = vmatprep.subr.mxu0 0.0
        %782 = vmatpush1.msra.mxu0 0.0
        %783 = vmatprep.subr.mxu0 0.0
        %784 = vmatpush1.msra.mxu0 0.0
        %785 = vmatprep.subr.mxu0 0.0
        %786 = vmatpush1.msra.mxu0 0.0
        %787 = vmatprep.subr.mxu0 0.0
        %788 = vmatpush1.msra.mxu0 0.0
        %789 = vmatprep.subr.mxu0 0.0
        %790 = vmatpush1.msra.mxu0 0.0
        %791 = vmatprep.subr.mxu0 0.0
        %792 = vmatpush1.msra.mxu0 0.0
        %793 = vmatprep.subr.mxu0 0.0
        %794 = vmatpush1.msra.mxu0 0.0
        %795 = vmatprep.subr.mxu0 0.0
        %796 = vmatpush1.msra.mxu0 0.0
        %797 = vmatprep.subr.mxu0 0.0
        %798 = vmatpush1.msra.mxu0 0.0
        %799 = vmatprep.subr.mxu0 0.0
        %800 = vmatpush1.msra.mxu0 %v764
        %801 = vmatprep.subr.mxu0 0.0
        %802 = vmatpush2.msra.mxu0 0.0
        %803 = vmatprep.subr.mxu0 0.0
        %804 = vmatpush2.msra.mxu0 0.0
        %805 = vmatprep.subr.mxu0 0.0
        %806 = vmatpush2.msra.mxu0 0.0
        %807 = vmatprep.subr.mxu0 0.0
        %808 = vmatpush2.msra.mxu0 0.0
        %809 = vmatprep.subr.mxu0 0.0
        %810 = vmatpush2.msra.mxu0 0.0
        %811 = vmatprep.subr.mxu0 0.0
        %812 = vmatpush2.msra.mxu0 0.0
        %813 = vmatprep.subr.mxu0 0.0
        %814 = vmatpush2.msra.mxu0 0.0
        %815 = vmatprep.subr.mxu0 0.0
        %816 = vmatpush2.msra.mxu0 0.0
        %817 = vmatprep.subr.mxu0 0.0
        %818 = vmatpush2.msra.mxu0 0.0
        %819 = vmatprep.subr.mxu0 0.0
        %820 = vmatpush2.msra.mxu0 0.0
        %821 = vmatprep.subr.mxu0 0.0
        %822 = vmatpush2.msra.mxu0 0.0
        %823 = vmatprep.subr.mxu0 0.0
        %824 = vmatpush2.msra.mxu0 0.0
        %825 = vmatprep.subr.mxu0 0.0
        %826 = vmatpush2.msra.mxu0 0.0
        %827 = vmatprep.subr.mxu0 0.0
        %828 = vmatpush2.msra.mxu0 0.0
        %829 = vmatprep.subr.mxu0 0.0
        %830 = vmatpush2.msra.mxu0 0.0
        %831 = vmatprep.subr.mxu0 0.0
        %832 = vmatpush2.msra.mxu0 0.0
        %833 = vmatprep.mubr.f32.mxu0 0.0
        %834 = vmatmul.mubr.f32.gmra.mxu0 %v767
        %v835 = vpop.f32.mrf.mxu0
        %v836 = vadd.f32 0.0, %v835
        %v837 = vpop.f32.mrf.mxu0
        %838 = vdwg.mxu0
        %839 = vrot.lane.b32.xlu0 %v509, 112
        %v840 = vpop.permute.xlu0 %839
        %841 = vrot.lane.b32.xlu0 %v510, 112
        %v842 = vpop.permute.xlu0 %841
        %v843 = vsel %vm512, %v840, 0
        %v845 = vsel %vm512, %v842, 0
        %847 = vmatprep.subr.mxu0 0.0
        %848 = vmatpush1.xpose.msra.mxu0 0.0
        %849 = vmatprep.subr.mxu0 0.0
        %850 = vmatpush1.xpose.msra.mxu0 0.0
        %851 = vmatprep.subr.mxu0 0.0
        %852 = vmatpush1.xpose.msra.mxu0 0.0
        %853 = vmatprep.subr.mxu0 0.0
        %854 = vmatpush1.xpose.msra.mxu0 0.0
        %855 = vmatprep.subr.mxu0 0.0
        %856 = vmatpush1.xpose.msra.mxu0 0.0
        %857 = vmatprep.subr.mxu0 0.0
        %858 = vmatpush1.xpose.msra.mxu0 0.0
        %859 = vmatprep.subr.mxu0 0.0
        %860 = vmatpush1.xpose.msra.mxu0 0.0
        %861 = vmatprep.subr.mxu0 0.0
        %862 = vmatpush1.xpose.msra.mxu0 0.0
        %863 = vmatprep.subr.mxu0 0.0
        %864 = vmatpush1.xpose.msra.mxu0 0.0
        %865 = vmatprep.subr.mxu0 0.0
        %866 = vmatpush1.xpose.msra.mxu0 0.0
        %867 = vmatprep.subr.mxu0 0.0
        %868 = vmatpush1.xpose.msra.mxu0 0.0
        %869 = vmatprep.subr.mxu0 0.0
        %870 = vmatpush1.xpose.msra.mxu0 0.0
        %871 = vmatprep.subr.mxu0 0.0
        %872 = vmatpush1.xpose.msra.mxu0 0.0
        %873 = vmatprep.subr.mxu0 0.0
        %874 = vmatpush1.xpose.msra.mxu0 0.0
        %875 = vmatprep.subr.mxu0 0.0
        %876 = vmatpush1.xpose.msra.mxu0 0.0
        %877 = vmatprep.subr.mxu0 0.0
        %878 = vmatpush1.xpose.msra.mxu0 %v845
        %879 = vmatprep.subr.mxu0 0.0
        %880 = vmatpush2.xpose.msra.mxu0 0.0
        %881 = vmatprep.subr.mxu0 0.0
        %882 = vmatpush2.xpose.msra.mxu0 0.0
        %883 = vmatprep.subr.mxu0 0.0
        %884 = vmatpush2.xpose.msra.mxu0 0.0
        %885 = vmatprep.subr.mxu0 0.0
        %886 = vmatpush2.xpose.msra.mxu0 0.0
        %887 = vmatprep.subr.mxu0 0.0
        %888 = vmatpush2.xpose.msra.mxu0 0.0
        %889 = vmatprep.subr.mxu0 0.0
        %890 = vmatpush2.xpose.msra.mxu0 0.0
        %891 = vmatprep.subr.mxu0 0.0
        %892 = vmatpush2.xpose.msra.mxu0 0.0
        %893 = vmatprep.subr.mxu0 0.0
        %894 = vmatpush2.xpose.msra.mxu0 0.0
        %895 = vmatprep.subr.mxu0 0.0
        %896 = vmatpush2.xpose.msra.mxu0 0.0
        %897 = vmatprep.subr.mxu0 0.0
        %898 = vmatpush2.xpose.msra.mxu0 0.0
        %899 = vmatprep.subr.mxu0 0.0
        %900 = vmatpush2.xpose.msra.mxu0 0.0
        %901 = vmatprep.subr.mxu0 0.0
        %902 = vmatpush2.xpose.msra.mxu0 0.0
        %903 = vmatprep.subr.mxu0 0.0
        %904 = vmatpush2.xpose.msra.mxu0 0.0
        %905 = vmatprep.subr.mxu0 0.0
        %906 = vmatpush2.xpose.msra.mxu0 0.0
        %907 = vmatprep.subr.mxu0 0.0
        %908 = vmatpush2.xpose.msra.mxu0 0.0
        %909 = vmatprep.subr.mxu0 0.0
        %910 = vmatpush2.xpose.msra.mxu0 0.0
        %911 = vmatprep.mubr.f32.mxu0 0.0
        %912 = vmatmul.mubr.f32.gmra.mxu0 %v843
        %v913 = vpop.f32.mrf.mxu0
        %v914 = vadd.f32 0.0, %v913
        %v915 = vpop.f32.mrf.mxu0
        %916 = vdwg.mxu0
        %v917 = vsel %vm512, %v914, -inf
        %918 = vmax.xlane.f32.xlu0 %v917
        %v919 = vpop.xlane.xlu0 %918
        %v920 = vsub.f32 %v914, %v919
        %v921 = vmul.f32 %v920, 1.442695
        %v922 = vpow.pop %v921
        %v923 = vsel %vm512, %v922, 0.0
        %924 = vadd.xlane.f32.xlu0 %v923
        %v925 = vpop.xlane.xlu0 %924
        %v926 = vrcp.pop %v925
        %v927 = vmul.f32 %v922, %v926
        %928 = vrot.lane.b32.xlu0 %v511, 112
        %v929 = vpop.permute.xlu0 %928
        %v932 = vsel %vm512, %v927, 0
        %934 = vmatprep.subr.mxu0 0.0
        %935 = vmatpush1.msra.mxu0 0.0
        %936 = vmatprep.subr.mxu0 0.0
        %937 = vmatpush1.msra.mxu0 0.0
        %938 = vmatprep.subr.mxu0 0.0
        %939 = vmatpush1.msra.mxu0 0.0
        %940 = vmatprep.subr.mxu0 0.0
        %941 = vmatpush1.msra.mxu0 0.0
        %942 = vmatprep.subr.mxu0 0.0
        %943 = vmatpush1.msra.mxu0 0.0
        %944 = vmatprep.subr.mxu0 0.0
        %945 = vmatpush1.msra.mxu0 0.0
        %946 = vmatprep.subr.mxu0 0.0
        %947 = vmatpush1.msra.mxu0 0.0
        %948 = vmatprep.subr.mxu0 0.0
        %949 = vmatpush1.msra.mxu0 0.0
        %950 = vmatprep.subr.mxu0 0.0
        %951 = vmatpush1.msra.mxu0 0.0
        %952 = vmatprep.subr.mxu0 0.0
        %953 = vmatpush1.msra.mxu0 0.0
        %954 = vmatprep.subr.mxu0 0.0
        %955 = vmatpush1.msra.mxu0 0.0
        %956 = vmatprep.subr.mxu0 0.0
        %957 = vmatpush1.msra.mxu0 0.0
        %958 = vmatprep.subr.mxu0 0.0
        %959 = vmatpush1.msra.mxu0 0.0
        %960 = vmatprep.subr.mxu0 0.0
        %961 = vmatpush1.msra.mxu0 0.0
        %962 = vmatprep.subr.mxu0 0.0
        %963 = vmatpush1.msra.mxu0 0.0
        %964 = vmatprep.subr.mxu0 0.0
        %965 = vmatpush1.msra.mxu0 %v929
        %966 = vmatprep.subr.mxu0 0.0
        %967 = vmatpush2.msra.mxu0 0.0
        %968 = vmatprep.subr.mxu0 0.0
        %969 = vmatpush2.msra.mxu0 0.0
        %970 = vmatprep.subr.mxu0 0.0
        %971 = vmatpush2.msra.mxu0 0.0
        %972 = vmatprep.subr.mxu0 0.0
        %973 = vmatpush2.msra.mxu0 0.0
        %974 = vmatprep.subr.mxu0 0.0
        %975 = vmatpush2.msra.mxu0 0.0
        %976 = vmatprep.subr.mxu0 0.0
        %977 = vmatpush2.msra.mxu0 0.0
        %978 = vmatprep.subr.mxu0 0.0
        %979 = vmatpush2.msra.mxu0 0.0
        %980 = vmatprep.subr.mxu0 0.0
        %981 = vmatpush2.msra.mxu0 0.0
        %982 = vmatprep.subr.mxu0 0.0
        %983 = vmatpush2.msra.mxu0 0.0
        %984 = vmatprep.subr.mxu0 0.0
        %985 = vmatpush2.msra.mxu0 0.0
        %986 = vmatprep.subr.mxu0 0.0
        %987 = vmatpush2.msra.mxu0 0.0
        %988 = vmatprep.subr.mxu0 0.0
        %989 = vmatpush2.msra.mxu0 0.0
        %990 = vmatprep.subr.mxu0 0.0
        %991 = vmatpush2.msra.mxu0 0.0
        %992 = vmatprep.subr.mxu0 0.0
        %993 = vmatpush2.msra.mxu0 0.0
        %994 = vmatprep.subr.mxu0 0.0
        %995 = vmatpush2.msra.mxu0 0.0
        %996 = vmatprep.subr.mxu0 0.0
        %997 = vmatpush2.msra.mxu0 0.0
        %998 = vmatprep.mubr.f32.mxu0 0.0
        %999 = vmatmul.mubr.f32.gmra.mxu0 %v932
        %v1000 = vpop.f32.mrf.mxu0
        %v1001 = vadd.f32 0.0, %v1000
        %v1002 = vpop.f32.mrf.mxu0
        %1003 = vdwg.mxu0
        %1004 = vrot.lane.b32.xlu0 %v509, 104
        %v1005 = vpop.permute.xlu0 %1004
        %1006 = vrot.lane.b32.xlu0 %v510, 104
        %v1007 = vpop.permute.xlu0 %1006
        %v1008 = vsel %vm512, %v1005, 0
        %v1010 = vsel %vm512, %v1007, 0
        %1012 = vmatprep.subr.mxu0 0.0
        %1013 = vmatpush1.xpose.msra.mxu0 0.0
        %1014 = vmatprep.subr.mxu0 0.0
        %1015 = vmatpush1.xpose.msra.mxu0 0.0
        %1016 = vmatprep.subr.mxu0 0.0
        %1017 = vmatpush1.xpose.msra.mxu0 0.0
        %1018 = vmatprep.subr.mxu0 0.0
        %1019 = vmatpush1.xpose.msra.mxu0 0.0
        %1020 = vmatprep.subr.mxu0 0.0
        %1021 = vmatpush1.xpose.msra.mxu0 0.0
        %1022 = vmatprep.subr.mxu0 0.0
        %1023 = vmatpush1.xpose.msra.mxu0 0.0
        %1024 = vmatprep.subr.mxu0 0.0
        %1025 = vmatpush1.xpose.msra.mxu0 0.0
        %1026 = vmatprep.subr.mxu0 0.0
        %1027 = vmatpush1.xpose.msra.mxu0 0.0
        %1028 = vmatprep.subr.mxu0 0.0
        %1029 = vmatpush1.xpose.msra.mxu0 0.0
        %1030 = vmatprep.subr.mxu0 0.0
        %1031 = vmatpush1.xpose.msra.mxu0 0.0
        %1032 = vmatprep.subr.mxu0 0.0
        %1033 = vmatpush1.xpose.msra.mxu0 0.0
        %1034 = vmatprep.subr.mxu0 0.0
        %1035 = vmatpush1.xpose.msra.mxu0 0.0
        %1036 = vmatprep.subr.mxu0 0.0
        %1037 = vmatpush1.xpose.msra.mxu0 0.0
        %1038 = vmatprep.subr.mxu0 0.0
        %1039 = vmatpush1.xpose.msra.mxu0 0.0
        %1040 = vmatprep.subr.mxu0 0.0
        %1041 = vmatpush1.xpose.msra.mxu0 0.0
        %1042 = vmatprep.subr.mxu0 0.0
        %1043 = vmatpush1.xpose.msra.mxu0 %v1010
        %1044 = vmatprep.subr.mxu0 0.0
        %1045 = vmatpush2.xpose.msra.mxu0 0.0
        %1046 = vmatprep.subr.mxu0 0.0
        %1047 = vmatpush2.xpose.msra.mxu0 0.0
        %1048 = vmatprep.subr.mxu0 0.0
        %1049 = vmatpush2.xpose.msra.mxu0 0.0
        %1050 = vmatprep.subr.mxu0 0.0
        %1051 = vmatpush2.xpose.msra.mxu0 0.0
        %1052 = vmatprep.subr.mxu0 0.0
        %1053 = vmatpush2.xpose.msra.mxu0 0.0
        %1054 = vmatprep.subr.mxu0 0.0
        %1055 = vmatpush2.xpose.msra.mxu0 0.0
        %1056 = vmatprep.subr.mxu0 0.0
        %1057 = vmatpush2.xpose.msra.mxu0 0.0
        %1058 = vmatprep.subr.mxu0 0.0
        %1059 = vmatpush2.xpose.msra.mxu0 0.0
        %1060 = vmatprep.subr.mxu0 0.0
        %1061 = vmatpush2.xpose.msra.mxu0 0.0
        %1062 = vmatprep.subr.mxu0 0.0
        %1063 = vmatpush2.xpose.msra.mxu0 0.0
        %1064 = vmatprep.subr.mxu0 0.0
        %1065 = vmatpush2.xpose.msra.mxu0 0.0
        %1066 = vmatprep.subr.mxu0 0.0
        %1067 = vmatpush2.xpose.msra.mxu0 0.0
        %1068 = vmatprep.subr.mxu0 0.0
        %1069 = vmatpush2.xpose.msra.mxu0 0.0
        %1070 = vmatprep.subr.mxu0 0.0
        %1071 = vmatpush2.xpose.msra.mxu0 0.0
        %1072 = vmatprep.subr.mxu0 0.0
        %1073 = vmatpush2.xpose.msra.mxu0 0.0
        %1074 = vmatprep.subr.mxu0 0.0
        %1075 = vmatpush2.xpose.msra.mxu0 0.0
        %1076 = vmatprep.mubr.f32.mxu0 0.0
        %1077 = vmatmul.mubr.f32.gmra.mxu0 %v1008
        %v1078 = vpop.f32.mrf.mxu0
        %v1079 = vadd.f32 0.0, %v1078
        %v1080 = vpop.f32.mrf.mxu0
        %1081 = vdwg.mxu0
        %v1082 = vsel %vm512, %v1079, -inf
        %1083 = vmax.xlane.f32.xlu0 %v1082
        %v1084 = vpop.xlane.xlu0 %1083
        %v1085 = vsub.f32 %v1079, %v1084
        %v1086 = vmul.f32 %v1085, 1.442695
        %v1087 = vpow.pop %v1086
        %v1088 = vsel %vm512, %v1087, 0.0
        %1089 = vadd.xlane.f32.xlu0 %v1088
        %v1090 = vpop.xlane.xlu0 %1089
        %v1091 = vrcp.pop %v1090
        %v1092 = vmul.f32 %v1087, %v1091
        %1093 = vrot.lane.b32.xlu0 %v511, 104
        %v1094 = vpop.permute.xlu0 %1093
        %v1097 = vsel %vm512, %v1092, 0
        %1099 = vmatprep.subr.mxu0 0.0
        %1100 = vmatpush1.msra.mxu0 0.0
        %1101 = vmatprep.subr.mxu0 0.0
        %1102 = vmatpush1.msra.mxu0 0.0
        %1103 = vmatprep.subr.mxu0 0.0
        %1104 = vmatpush1.msra.mxu0 0.0
        %1105 = vmatprep.subr.mxu0 0.0
        %1106 = vmatpush1.msra.mxu0 0.0
        %1107 = vmatprep.subr.mxu0 0.0
        %1108 = vmatpush1.msra.mxu0 0.0
        %1109 = vmatprep.subr.mxu0 0.0
        %1110 = vmatpush1.msra.mxu0 0.0
        %1111 = vmatprep.subr.mxu0 0.0
        %1112 = vmatpush1.msra.mxu0 0.0
        %1113 = vmatprep.subr.mxu0 0.0
        %1114 = vmatpush1.msra.mxu0 0.0
        %1115 = vmatprep.subr.mxu0 0.0
        %1116 = vmatpush1.msra.mxu0 0.0
        %1117 = vmatprep.subr.mxu0 0.0
        %1118 = vmatpush1.msra.mxu0 0.0
        %1119 = vmatprep.subr.mxu0 0.0
        %1120 = vmatpush1.msra.mxu0 0.0
        %1121 = vmatprep.subr.mxu0 0.0
        %1122 = vmatpush1.msra.mxu0 0.0
        %1123 = vmatprep.subr.mxu0 0.0
        %1124 = vmatpush1.msra.mxu0 0.0
        %1125 = vmatprep.subr.mxu0 0.0
        %1126 = vmatpush1.msra.mxu0 0.0
        %1127 = vmatprep.subr.mxu0 0.0
        %1128 = vmatpush1.msra.mxu0 0.0
        %1129 = vmatprep.subr.mxu0 0.0
        %1130 = vmatpush1.msra.mxu0 %v1094
        %1131 = vmatprep.subr.mxu0 0.0
        %1132 = vmatpush2.msra.mxu0 0.0
        %1133 = vmatprep.subr.mxu0 0.0
        %1134 = vmatpush2.msra.mxu0 0.0
        %1135 = vmatprep.subr.mxu0 0.0
        %1136 = vmatpush2.msra.mxu0 0.0
        %1137 = vmatprep.subr.mxu0 0.0
        %1138 = vmatpush2.msra.mxu0 0.0
        %1139 = vmatprep.subr.mxu0 0.0
        %1140 = vmatpush2.msra.mxu0 0.0
        %1141 = vmatprep.subr.mxu0 0.0
        %1142 = vmatpush2.msra.mxu0 0.0
        %1143 = vmatprep.subr.mxu0 0.0
        %1144 = vmatpush2.msra.mxu0 0.0
        %1145 = vmatprep.subr.mxu0 0.0
        %1146 = vmatpush2.msra.mxu0 0.0
        %1147 = vmatprep.subr.mxu0 0.0
        %1148 = vmatpush2.msra.mxu0 0.0
        %1149 = vmatprep.subr.mxu0 0.0
        %1150 = vmatpush2.msra.mxu0 0.0
        %1151 = vmatprep.subr.mxu0 0.0
        %1152 = vmatpush2.msra.mxu0 0.0
        %1153 = vmatprep.subr.mxu0 0.0
        %1154 = vmatpush2.msra.mxu0 0.0
        %1155 = vmatprep.subr.mxu0 0.0
        %1156 = vmatpush2.msra.mxu0 0.0
        %1157 = vmatprep.subr.mxu0 0.0
        %1158 = vmatpush2.msra.mxu0 0.0
        %1159 = vmatprep.subr.mxu0 0.0
        %1160 = vmatpush2.msra.mxu0 0.0
        %1161 = vmatprep.subr.mxu0 0.0
        %1162 = vmatpush2.msra.mxu0 0.0
        %1163 = vmatprep.mubr.f32.mxu0 0.0
        %1164 = vmatmul.mubr.f32.gmra.mxu0 %v1097
        %v1165 = vpop.f32.mrf.mxu0
        %v1166 = vadd.f32 0.0, %v1165
        %v1167 = vpop.f32.mrf.mxu0
        %1168 = vdwg.mxu0
        %1170 = vrot.lane.b32.xlu0 %v836, 8
        %v1171 = vpop.permute.xlu0 %1170
        %1174 = vrot.lane.b32.xlu0 %v1001, 16
        %v1175 = vpop.permute.xlu0 %1174
        %1178 = vrot.lane.b32.xlu0 %v1166, 24
        %v1179 = vpop.permute.xlu0 %1178
        %v1181 = vsel %vm512, %v670, %v1171
        %vm1182 = vcmask 130048
        %v1183 = vsel %vm1182, %v1181, %v1175
        %vm1184 = vcmask 195584
        %v1185 = vsel %vm1184, %v1183, %v1179
        %1186 = vst.msk [vmem:[%s270] sm:$0xff] %vm435, %v1185
        %s1187 = sand.u32 %s134, 1
        %s1188 = scalar_lea.sflag [#allocation6], %s1187
        %s1189 = sand.u32 %s134, 1
        %s1190 = smul.addr %s1189, 8
        %s1191 = scalar_lea.vmem [#allocation12], %s1190
        // Predicated region
        $region57: #{tpu_custom_call.1} parent=35 // pred_check
          %p1192 = pneg %p144
        $region58: #{tpu_custom_call.1} parent=35 // pred_check_branch
          %1194 = sbr.rel (%p1192) target = $region60
        $region59: #{tpu_custom_call.1} parent=35 // pred_region
          %s1196 = ssub.s32 128, 128
          %1197 = vsyncadd %s1188, %s1196
          %s1198 = sadd.s32 %s28, %s27
          %s1199 = smul.addr %s1198, 128
          %s1200 = scalar_lea.hbm %s4, %s1199
          %s1202 = sshll.u32 %s1191, 4
          %s1203 = int_to_ptr.vmem [resolvable:$true] %s1202
          %1205 = dma.vmem_to_hbm [thread:$0]  %s1203, 128, %s1200, %s1188
        $region60: #{tpu_custom_call.1} parent=35 // pred_fallthru
          _
      $region36: #{tpu_custom_call.1} parent=5 // pred_fallthru
        _
      %p1206 = scmp.le.s32.totalorder 2, %s18
      // Predicated region
      $region61: #{tpu_custom_call.1} parent=5 // pred_check
        %p1207 = pneg %p1206
      $region62: #{tpu_custom_call.1} parent=5 // pred_check_branch
        %1209 = sbr.rel (%p1207) target = $region64
      $region63: #{tpu_custom_call.1} parent=5 // pred_region
        %s1210 = ssub.s32 %s18, 2
        // Predicated region
        $region65: #{tpu_custom_call.1} parent=63 // pred_check
          %p1211 = pneg %p150
        $region66: #{tpu_custom_call.1} parent=63 // pred_check_branch
          %1213 = sbr.rel (%p1211) target = $region68
        $region67: #{tpu_custom_call.1} parent=63 // pred_region
          %s1214 = sand.u32 %s135, 1
          %s1215 = scalar_lea.sflag [#allocation6], %s1214
          %s1216 = sand.u32 %s135, 1
          %s1217 = smul.addr %s1216, 8
          %s1218 = scalar_lea.vmem [#allocation12], %s1217
          %1219 = dma.done %s1215, 128
        $region68: #{tpu_custom_call.1} parent=63 // pred_fallthru
          _
      $region64: #{tpu_custom_call.1} parent=5 // pred_fallthru
        _
    $region6: #{tpu_custom_call.1} parent=1 // loop_footer
      %s22 = sadd.s32 1, %s18
    $region7: #{tpu_custom_call.1} parent=1 // loop_footer_branch
      %17 = sbr.rel target = $region3
    $region8: #{tpu_custom_call.1} parent=1 // loop_exit
      _
    %1220 = vsyncpa [#allocation5], 1
    %s1221 = scalar_lea.sflag [#allocation5], 1
    %1222 = vsyncpa %s1221, 1
    %1223 = vsyncpa [#allocation8], 1
    %1224 = vsyncpa [#allocation11], 1
    %1225 = vsyncpa [#allocation6], 1
    %s1226 = scalar_lea.sflag [#allocation6], 1
    %1227 = vsyncpa %s1226, 1

</llo_original>
